<compile_context>
chip_gen: v7x
topology: tpu7x:2x2x1
jax: 0.10.0
libtpu: 0.0.40
codegen_flags: <defaults>
</compile_context>

<pallas_src>
import functools
import math

import jax
import jax.numpy as jnp
from jax.experimental import pallas as pl
from jax.experimental.pallas import tpu as pltpu


def _pre_scale_norm_kernel(g_ref, x_ref, o_ref, *, eps):
    # g_ref: (1, 1) scalar in SMEM;  x_ref/o_ref: (tile_rows, dim) in VMEM
    x = x_ref[...].astype(jnp.float32)
    sq = jnp.sum(x * x, axis=-1, keepdims=True)
    # 1 / max(sqrt(sq), eps) == rsqrt(max(sq, eps^2)).  rsqrt runs on the EUP
    # (otherwise idle here), keeping divides off the VPU critical path, and
    # the clamp keeps the zero-row case finite (matches torch .clamp(min=eps)).
    eps32 = jnp.float32(eps)
    inv_n = jax.lax.rsqrt(jnp.maximum(sq, eps32 * eps32))
    g = g_ref[0, 0]
    o_ref[...] = (x * (g * inv_n)).astype(o_ref.dtype)


def pre_scale_norm(x, g, eps=1e-5):
    """ScaleNorm along the last axis of x, scaled by scalar g."""
    orig_shape = x.shape
    dim = orig_shape[-1]
    rows = math.prod(orig_shape[:-1])
    x2 = x.reshape(rows, dim)

    itemsize = jnp.dtype(x.dtype).itemsize
    # Dtype-aware sublane multiple: 8 for 4-byte, 16 for 2-byte, 32 for 1-byte.
    sub = max(8, 32 // itemsize)

    # Big streaming tile: ~2 MiB per input block.  With double-buffered
    # input + output (+ f32 intermediates) that stays well inside a 32 MiB
    # scoped-VMEM budget, which is valid on v5e (128 MiB phys), v6e (128 MiB)
    # and v7x (64 MiB phys / 32 MiB scoped default).
    target_block_bytes = 2 * 1024 * 1024
    tile_rows = max(sub, (target_block_bytes // max(1, dim * itemsize)) // sub * sub)
    rows_padded = ((rows + sub - 1) // sub) * sub
    tile_rows = min(tile_rows, rows_padded)

    # cdiv grid: no giant single-block fallback; Pallas pads/masks the tail tile.
    grid = (pl.cdiv(rows, tile_rows),)

    out = pl.pallas_call(
        functools.partial(_pre_scale_norm_kernel, eps=eps),
        out_shape=jax.ShapeDtypeStruct((rows, dim), x.dtype),
        grid_spec=pltpu.PrefetchScalarGridSpec(
            num_scalar_prefetch=0,
            grid=grid,
            in_specs=[
                # scalar gain g lives in SMEM, passed whole to every grid step
                pl.BlockSpec(memory_space=pltpu.MemorySpace.SMEM),
                pl.BlockSpec((tile_rows, dim), lambda i: (i, 0)),
            ],
            out_specs=pl.BlockSpec((tile_rows, dim), lambda i: (i, 0)),
        ),
        compiler_params=pltpu.CompilerParams(
            # "parallel" lets v7x shard the row-tile axis across its 2 TCs;
            # no-op on v5e/v6e.
            dimension_semantics=("parallel",),
            # Explicit VMEM budget, safe on all generations (v5e default is
            # only 16 MiB scoped; v7x physical cap is 64 MiB).
            vmem_limit_bytes=32 * 1024 * 1024,
        ),
    )(g.reshape(1, 1).astype(jnp.float32), x2)

    return out.reshape(orig_shape)


def pre_scale_norm_module(x, g, eps=1e-5):
    """Full PreScaleNorm.forward: fn(scale_norm(x))."""
    y = pre_scale_norm(x, g, eps=eps)
    # TODO(synk): `fn` is an arbitrary wrapped sub-module in the PyTorch code;
    # identity is used here.  When fn is known (e.g. attention / FFN matmul),
    # fuse its first op into this pallas_call so the normalized activation
    # never round-trips through HBM (the largest remaining win).
    return y


if __name__ == "__main__":
    key = jax.random.PRNGKey(0)
    # Small but lane-dense demo shape: norm over dim=128 (full 128-lane vregs,
    # unmasked stores), rows = batch*seq = 32 (multiple of the f32 sublane 8).
    batch, seq, dim = 2, 16, 128
    x = jax.random.normal(key, (batch, seq, dim), dtype=jnp.float32)

    # Parameter g = ones(1), as in nn.Parameter(torch.ones(1))
    g = jnp.ones((1,), dtype=jnp.float32)
    eps = 1e-5

    out = pre_scale_norm_module(x, g, eps=eps)
    out = jax.block_until_ready(out)

    # Pure-JAX reference check
    n_ref = jnp.maximum(jnp.linalg.norm(x, axis=-1, keepdims=True), eps)
    ref = x / n_ref * g[0]
    assert out.shape == x.shape and out.dtype == x.dtype
    assert jnp.allclose(out, ref, atol=1e-5, rtol=1e-5)

    print("KERNEL_OK")
</pallas_src>

<mosaic_0001>
module attributes {stable_mosaic.version = 11 : i64} {
  func.func @_pre_scale_norm_kernel(%arg0: i32, %arg1: memref<1x1xf32, #tpu.memory_space<smem>>, %arg2: memref<32x128xf32, #tpu.memory_space<vmem>>, %arg3: memref<32x128xf32, #tpu.memory_space<vmem>>) attributes {dimension_semantics = [#tpu.dimension_semantics<parallel>], iteration_bounds = array<i64: 1>, scalar_prefetch = 0 : i64, scratch_operands = 0 : i64, tpu.core_type = #tpu.core_type<tc>, window_params = [{transform_indices = @transform_0, window_bounds = array<i64: 1, 1>}, {transform_indices = @transform_1, window_bounds = array<i64: 32, 128>}, {transform_indices = @transform_2, window_bounds = array<i64: 32, 128>}]} {
    %c0 = arith.constant 0 : index
    %c0_0 = arith.constant 0 : index
    %0 = vector.load %arg2[%c0, %c0_0] : memref<32x128xf32, #tpu.memory_space<vmem>>, vector<32x128xf32>
    %1 = arith.mulf %0, %0 : vector<32x128xf32>
    %cst = arith.constant dense<0.000000e+00> : vector<32xf32>
    %2 = vector.multi_reduction <add>, %1, %cst [1] : vector<32x128xf32> to vector<32xf32>
    %3 = vector.shape_cast %2 : vector<32xf32> to vector<32x1xf32>
    %cst_1 = arith.constant 9.99999974E-6 : f32
    %cst_2 = arith.constant 9.99999974E-6 : f32
    %4 = arith.mulf %cst_1, %cst_2 : f32
    %5 = vector.broadcast %4 : f32 to vector<32x1xf32>
    %6 = arith.maximumf %3, %5 : vector<32x1xf32>
    %7 = math.rsqrt %6 : vector<32x1xf32>
    %c0_3 = arith.constant 0 : index
    %c0_4 = arith.constant 0 : index
    %8 = memref.load %arg1[%c0_3, %c0_4] : memref<1x1xf32, #tpu.memory_space<smem>>
    %9 = vector.broadcast %8 : f32 to vector<32x1xf32>
    %10 = arith.mulf %9, %7 : vector<32x1xf32>
    %11 = vector.broadcast %10 : vector<32x1xf32> to vector<32x128xf32>
    %12 = arith.mulf %0, %11 : vector<32x128xf32>
    %c0_5 = arith.constant 0 : index
    %c0_6 = arith.constant 0 : index
    %13 = vector.load %arg3[%c0_5, %c0_6] : memref<32x128xf32, #tpu.memory_space<vmem>>, vector<32x128xf32>
    tpu.vector_store %arg3[%c0_5, %c0_6], %12 {strides = array<i32>} : memref<32x128xf32, #tpu.memory_space<vmem>>, vector<32x128xf32>,
    return
  }
  func.func @transform_0(%arg0: i32) -> (i32, i32) {
    %c0_i32 = arith.constant 0 : i32
    %c0_i32_0 = arith.constant 0 : i32
    %c0_i32_1 = arith.constant 0 : i32
    return %c0_i32, %c0_i32_0 : i32, i32
  }
  func.func @transform_1(%arg0: i32) -> (i32, i32) {
    %c0_i32 = arith.constant 0 : i32
    %c0_i32_0 = arith.constant 0 : i32
    return %arg0, %c0_i32 : i32, i32
  }
  func.func @transform_2(%arg0: i32) -> (i32, i32) {
    %c0_i32 = arith.constant 0 : i32
    %c0_i32_0 = arith.constant 0 : i32
    return %arg0, %c0_i32 : i32, i32
  }
}

</mosaic_0001>

<llo_original>
// kernel: tpu_custom_call.1
$region0: #{tpu_custom_call.1}
  #allocation0 [shape = 'u32[]', space=smem, size = 0x4, offset = 0x4, fixed_abs, tag = 'smem constant byte address 0x4 - core index']
  #allocation1 [shape = 'u32[144,128]{1,0:T(1,128)}', space=vmem, size = 0x12000, scoped, tag = 'internal scratch']
  #allocation2 [shape = 'f32[1,1]{1,0:T(1,128)S(6)}', space=smem, size = 0x200, scoped, tag = 'scoped memory for tpu_custom_call.1']
  %s0 = inlined_call_operand.<no memory space> [shape: f32[1,1], index: 0, kind: input, shape index: {}]
  %s1 = inlined_call_operand.hbm [shape: f32[32,128], index: 1, kind: input, shape index: {}]
  %s2 = inlined_call_operand.hbm [shape: f32[32,128], index: 2, kind: output, shape index: {}]
  %s3 = sld [smem:[#allocation0]]
  $region22: #{tpu_custom_call.1} parent=0
    _
  %s5 = ssub.s32 1, %s3
  %s6 = scalar_select 0, %s5, %s3
  %7 = sst [smem:[#allocation2]] %s0
  $region1: #{tpu_custom_call.1} parent=0
    #allocation3 [shape = 'u8[16384]{0}', space=vmem, size = 0x4000, scoped, tag = 'input window, operand 1, single buffered']
    #allocation4 [shape = 's32[1]{0}', space=sflag, size = 0x4, scoped, tag = 'scoped memory for tpu_custom_call.1']
    #allocation5 [shape = 's32[1]{0}', space=sflag, size = 0x4, scoped, tag = 'scoped memory for tpu_custom_call.1']
    #allocation6 [shape = 'u8[16384]{0}', space=vmem, size = 0x4000, scoped, tag = 'output window, operand 0, single buffered']
    %8 = vsyncpa [#allocation4], 0
    %9 = vsyncpa [#allocation5], 0
    // Predicated region
    $region2: #{tpu_custom_call.1} parent=1 // pred_check
      _
    $region3: #{tpu_custom_call.1} parent=1 // pred_check_branch
      %11 = sbr.rel (0) target = $region5
    $region4: #{tpu_custom_call.1} parent=1 // pred_region
      _
    $region5: #{tpu_custom_call.1} parent=1 // pred_fallthru
      _
    // Predicated region
    $region6: #{tpu_custom_call.1} parent=1 // pred_check
      _
    $region7: #{tpu_custom_call.1} parent=1 // pred_check_branch
      %13 = sbr.rel (0) target = $region9
    $region8: #{tpu_custom_call.1} parent=1 // pred_region
      %s15 = ssub.s32 512, 512
      %16 = vsyncadd [#allocation4], %s15
      %s17 = sshll.u32 [#allocation3], 4
      %s18 = int_to_ptr.vmem [resolvable:$true] %s17
      %23 = dma.hbm_to_vmem [thread:$0]  %s1, 512, %s18, [#allocation4], 128, 128, 8
    $region9: #{tpu_custom_call.1} parent=1 // pred_fallthru
      _
    // Predicated region
    $region10: #{tpu_custom_call.1} parent=1 // pred_check
      _
    $region11: #{tpu_custom_call.1} parent=1 // pred_check_branch
      %25 = sbr.rel (0) target = $region13
    $region12: #{tpu_custom_call.1} parent=1 // pred_region
      %26 = dma.done [#allocation4], 512
    $region13: #{tpu_custom_call.1} parent=1 // pred_fallthru
      _
    %v27 = vld [vmem:[#allocation3] sm:$0xff]
    %v28 = vld [vmem:[#allocation3 + $0x8] sm:$0xff]
    %v29 = vld [vmem:[#allocation3 + $0x10] sm:$0xff]
    %v30 = vld [vmem:[#allocation3 + $0x18] sm:$0xff]
    %v31 = vmul.f32 %v27, %v27
    %v32 = vmul.f32 %v28, %v28
    %v33 = vmul.f32 %v29, %v29
    %v34 = vmul.f32 %v30, %v30
    %35 = vadd.xlane.f32.xlu0 %v31
    %v36 = vpop.xlane.xlu0 %35
    %37 = vadd.xlane.f32.xlu0 %v32
    %v38 = vpop.xlane.xlu0 %37
    %39 = vadd.xlane.f32.xlu0 %v33
    %v40 = vpop.xlane.xlu0 %39
    %41 = vadd.xlane.f32.xlu0 %v34
    %v42 = vpop.xlane.xlu0 %41
    %v43 = vmax.f32 %v36, 9.9999994e-11
    %v44 = vmax.f32 %v38, 9.9999994e-11
    %v45 = vmax.f32 %v40, 9.9999994e-11
    %v46 = vmax.f32 %v42, 9.9999994e-11
    %v47 = vrsqrt.pop %v43
    %v48 = vrsqrt.pop %v44
    %v49 = vrsqrt.pop %v45
    %v50 = vrsqrt.pop %v46
    %s51 = sld [smem:[#allocation2]]
    %v52 = vstv %s51
    %v53 = vmul.f32 %v52, %v47
    %v54 = vmul.f32 %v52, %v48
    %v55 = vmul.f32 %v52, %v49
    %v56 = vmul.f32 %v52, %v50
    %v57 = vmul.f32 %v27, %v53
    %v58 = vmul.f32 %v28, %v54
    %v59 = vmul.f32 %v29, %v55
    %v60 = vmul.f32 %v30, %v56
    %61 = vst [vmem:[#allocation6] sm:$0xff] %v57
    %62 = vst [vmem:[#allocation6 + $0x8] sm:$0xff] %v58
    %63 = vst [vmem:[#allocation6 + $0x10] sm:$0xff] %v59
    %64 = vst [vmem:[#allocation6 + $0x18] sm:$0xff] %v60
    // Predicated region
    $region14: #{tpu_custom_call.1} parent=1 // pred_check
      _
    $region15: #{tpu_custom_call.1} parent=1 // pred_check_branch
      %66 = sbr.rel (0) target = $region17
    $region16: #{tpu_custom_call.1} parent=1 // pred_region
      %s68 = ssub.s32 512, 512
      %69 = vsyncadd [#allocation5], %s68
      %s70 = sshll.u32 [#allocation6], 4
      %s71 = int_to_ptr.vmem [resolvable:$true] %s70
      %76 = dma.vmem_to_hbm [thread:$0]  %s71, 512, %s2, [#allocation5], 128, 128, 8
    $region17: #{tpu_custom_call.1} parent=1 // pred_fallthru
      _
    // Predicated region
    $region18: #{tpu_custom_call.1} parent=1 // pred_check
      _
    $region19: #{tpu_custom_call.1} parent=1 // pred_check_branch
      %78 = sbr.rel (0) target = $region21
    $region20: #{tpu_custom_call.1} parent=1 // pred_region
      %79 = dma.done [#allocation5], 512
    $region21: #{tpu_custom_call.1} parent=1 // pred_fallthru
      _
    %80 = vsyncpa [#allocation4], 1
    %81 = vsyncpa [#allocation5], 1

</llo_original>
